<compile_context>
chip_gen: v7x
topology: tpu7x:2x2x1
jax: 0.10.0
libtpu: 0.0.40
codegen_flags: <defaults>
</compile_context>

<pallas_src>
import functools

import jax
import jax.numpy as jnp
from jax.experimental import pallas as pl
from jax.experimental.pallas import tpu as pltpu


def _round_up(x, m):
    return (x + m - 1) // m * m


def _embedding_kernel(ids_ref, table_ref, pe_ref, out_ref, *,
                      seq_len, drop_prob, training, seed):
    # ids_ref:   SMEM (B*seq_len,) int32  token ids (scalar prefetch)
    # table_ref: VMEM (V, Dp)   float32   embedding table (padding row = 0)
    # pe_ref:    VMEM (ts, Dp)  float32   positional encoding rows of this block
    # out_ref:   VMEM (ts, Dp)  float32   one tile of the flattened output
    s_blk = pl.program_id(0)
    b = pl.program_id(1)
    ts, dp = out_ref.shape
    base = b * seq_len + s_blk * ts

    # Row gather from the VMEM-resident table, driven by SMEM scalar ids.
    def gather_row(t, carry):
        tok = ids_ref[base + t]
        out_ref[pl.ds(t, 1), :] = table_ref[pl.ds(tok, 1), :]
        return carry

    jax.lax.fori_loop(0, ts, gather_row, 0)

    y = out_ref[...] + pe_ref[...]

    if training and drop_prob > 0.0:
        # Inverted dropout: compare 24 random bits against an int threshold.
        pltpu.prng_seed(seed + b * pl.num_programs(0) + s_blk)
        bits = pltpu.bitcast(pltpu.prng_random_bits((ts, dp)), jnp.uint32)
        thresh = jnp.uint32(int(drop_prob * (1 << 24)))
        keep = (bits >> 8) >= thresh
        y = jnp.where(keep, y * (1.0 / (1.0 - drop_prob)), 0.0)

    out_ref[...] = y


def embedding_forward(x, table, pe, *, drop_prob=0.1, training=False,
                      seed=0, max_block_tokens=512):
    """x: (B, S) int32 token ids -> (B, S, D) float32."""
    B, S = x.shape
    V, D = table.shape
    assert pe.shape[0] >= S and pe.shape[1] == D

    # Lane-dense model dim (multiple of 128) and sublane-friendly seq tiling.
    Dp = _round_up(D, 128)
    Sp = _round_up(S, 8)
    ts = 8
    for cand in range(8, min(Sp, max_block_tokens) + 1, 8):
        if Sp % cand == 0:
            ts = cand
    n_s = Sp // ts

    table_p = jnp.pad(table.astype(jnp.float32), ((0, 0), (0, Dp - D)))
    pe_p = jnp.pad(pe[:S].astype(jnp.float32), ((0, Sp - S), (0, Dp - D)))
    # Padded sequence positions get padding_idx=1 (a zero embedding row).
    ids = jnp.pad(x.astype(jnp.int32), ((0, 0), (0, Sp - S)), constant_values=1)
    ids_flat = ids.reshape(B * Sp)

    kernel = functools.partial(_embedding_kernel, seq_len=Sp,
                               drop_prob=drop_prob, training=training,
                               seed=seed)

    out = pl.pallas_call(
        kernel,
        out_shape=jax.ShapeDtypeStruct((B * Sp, Dp), jnp.float32),
        grid_spec=pltpu.PrefetchScalarGridSpec(
            num_scalar_prefetch=1,                 # ids -> SMEM
            grid=(n_s, B),                         # batch innermost: PE reused
            in_specs=[
                pl.BlockSpec((V, Dp), lambda s, b, ids: (0, 0)),    # table (resident)
                pl.BlockSpec((ts, Dp), lambda s, b, ids: (s, 0)),   # PE rows
            ],
            out_specs=pl.BlockSpec((ts, Dp), lambda s, b, ids: (b * n_s + s, 0)),
        ),
        compiler_params=pltpu.CompilerParams(
            dimension_semantics=("parallel", "parallel")),
    )(ids_flat, table_p, pe_p)

    return out.reshape(B, Sp, Dp)[:, :S, :D]


if __name__ == "__main__":
    txt_len, d_model, max_len = 64, 32, 64
    B, S = 2, 16

    key = jax.random.PRNGKey(0)
    k_tab, k_ids = jax.random.split(key)

    # nn.Embedding(txt_len, d_model, padding_idx=1): N(0,1) init, row 1 zeroed.
    table = jax.random.normal(k_tab, (txt_len, d_model), dtype=jnp.float32)
    table = table.at[1].set(0.0)

    # Sinusoidal positional-encoding buffer (max_len, d_model).
    pos = jnp.arange(max_len, dtype=jnp.float32)[:, None]
    i2 = jnp.arange(0, d_model, 2, dtype=jnp.float32)
    div = jnp.power(10000.0, i2 / d_model)
    pe = jnp.zeros((max_len, d_model), jnp.float32)
    pe = pe.at[:, 0::2].set(jnp.sin(pos / div))
    pe = pe.at[:, 1::2].set(jnp.cos(pos / div))

    x = jax.random.randint(k_ids, (B, S), 0, txt_len, dtype=jnp.int32)

    # Eval-mode forward (dropout is identity, matching model.eval()).
    out = embedding_forward(x, table, pe, drop_prob=0.1, training=False)
    out = jax.block_until_ready(out)

    # Plain-JAX reference for correctness.
    ref = table[x] + pe[:S][None, :, :]
    assert out.shape == (B, S, d_model)
    assert out.dtype == jnp.float32
    assert jnp.allclose(out, ref, atol=1e-5), "mismatch vs reference"

    print("KERNEL_OK")
</pallas_src>

<mosaic_0001>
module attributes {stable_mosaic.version = 11 : i64} {
  func.func @_embedding_kernel(%arg0: i32, %arg1: i32, %arg2: memref<32xi32, #tpu.memory_space<smem>>, %arg3: memref<64x128xf32, #tpu.memory_space<vmem>>, %arg4: memref<16x128xf32, #tpu.memory_space<vmem>>, %arg5: memref<16x128xf32, #tpu.memory_space<vmem>>) attributes {dimension_semantics = [#tpu.dimension_semantics<parallel>, #tpu.dimension_semantics<parallel>], iteration_bounds = array<i64: 1, 2>, scalar_prefetch = 1 : i64, scratch_operands = 0 : i64, tpu.core_type = #tpu.core_type<tc>, window_params = [{pipeline_mode = #tpu.pipeline_mode<synchronous>, transform_indices = @transform_0, window_bounds = array<i64: 64, 128>}, {transform_indices = @transform_1, window_bounds = array<i64: 16, 128>}, {transform_indices = @transform_2, window_bounds = array<i64: 16, 128>}]} {
    %c16_i32 = arith.constant 16 : i32
    %0 = arith.muli %arg1, %c16_i32 : i32
    %c16_i32_0 = arith.constant 16 : i32
    %1 = arith.muli %arg0, %c16_i32_0 : i32
    %2 = arith.addi %0, %1 : i32
    %c0_i32 = arith.constant 0 : i32
    %c16_i32_1 = arith.constant 16 : i32
    %3 = arith.addi %c0_i32, %c16_i32_1 : i32
    %c1_i32 = arith.constant 1 : i32
    scf.for %arg6 = %c0_i32 to %3 step %c1_i32  : i32 {
      %8 = arith.addi %2, %arg6 : i32
      %9 = arith.index_cast %8 : i32 to index
      %10 = memref.load %arg2[%9] : memref<32xi32, #tpu.memory_space<smem>>
      %11 = arith.index_cast %10 : i32 to index
      %c0_8 = arith.constant 0 : index
      %12 = vector.load %arg3[%11, %c0_8] : memref<64x128xf32, #tpu.memory_space<vmem>>, vector<1x128xf32>
      %13 = arith.index_cast %arg6 : i32 to index
      %c0_9 = arith.constant 0 : index
      %14 = vector.load %arg5[%13, %c0_9] : memref<16x128xf32, #tpu.memory_space<vmem>>, vector<1x128xf32>
      tpu.vector_store %arg5[%13, %c0_9], %12 {strides = array<i32>} : memref<16x128xf32, #tpu.memory_space<vmem>>, vector<1x128xf32>,
    }
    %c16_i32_2 = arith.constant 16 : i32
    %c0 = arith.constant 0 : index
    %c0_3 = arith.constant 0 : index
    %4 = vector.load %arg5[%c0, %c0_3] : memref<16x128xf32, #tpu.memory_space<vmem>>, vector<16x128xf32>
    %c0_4 = arith.constant 0 : index
    %c0_5 = arith.constant 0 : index
    %5 = vector.load %arg4[%c0_4, %c0_5] : memref<16x128xf32, #tpu.memory_space<vmem>>, vector<16x128xf32>
    %6 = arith.addf %4, %5 : vector<16x128xf32>
    %c0_6 = arith.constant 0 : index
    %c0_7 = arith.constant 0 : index
    %7 = vector.load %arg5[%c0_6, %c0_7] : memref<16x128xf32, #tpu.memory_space<vmem>>, vector<16x128xf32>
    tpu.vector_store %arg5[%c0_6, %c0_7], %6 {strides = array<i32>} : memref<16x128xf32, #tpu.memory_space<vmem>>, vector<16x128xf32>,
    return
  }
  func.func @transform_0(%arg0: i32, %arg1: i32, %arg2: memref<32xi32, #tpu.memory_space<smem>>) -> (i32, i32) {
    %c0_i32 = arith.constant 0 : i32
    %c0_i32_0 = arith.constant 0 : i32
    %c0_i32_1 = arith.constant 0 : i32
    return %c0_i32, %c0_i32_0 : i32, i32
  }
  func.func @transform_1(%arg0: i32, %arg1: i32, %arg2: memref<32xi32, #tpu.memory_space<smem>>) -> (i32, i32) {
    %c0_i32 = arith.constant 0 : i32
    %c0_i32_0 = arith.constant 0 : i32
    return %arg0, %c0_i32 : i32, i32
  }
  func.func @transform_2(%arg0: i32, %arg1: i32, %arg2: memref<32xi32, #tpu.memory_space<smem>>) -> (i32, i32) {
    %c1_i32 = arith.constant 1 : i32
    %0 = arith.muli %arg1, %c1_i32 : i32
    %1 = arith.addi %0, %arg0 : i32
    %c0_i32 = arith.constant 0 : i32
    %c0_i32_0 = arith.constant 0 : i32
    return %1, %c0_i32 : i32, i32
  }
}

</mosaic_0001>

<llo_original>
// kernel: tpu_custom_call.1
$region0: #{tpu_custom_call.1}
  #allocation0 [shape = 'u32[]', space=smem, size = 0x4, offset = 0x4, fixed_abs, tag = 'smem constant byte address 0x4 - core index']
  #allocation1 [shape = 'u32[144,128]{1,0:T(1,128)}', space=vmem, size = 0x12000, scoped, tag = 'internal scratch']
  #allocation2 [shape = 's32[1]{0}', space=sflag, size = 0x4, scoped, tag = 'scoped memory for tpu_custom_call.1']
  #allocation3 [shape = 'u8[512]{0}', space=smem, size = 0x200, scoped, tag = 'prefetched SMEM operand 0']
  %s0 = inlined_call_operand.hbm [shape: s32[32], index: 0, kind: input, shape index: {}]
  %s1 = inlined_call_operand.hbm [shape: f32[64,128], index: 1, kind: input, shape index: {}]
  %s2 = inlined_call_operand.hbm [shape: f32[16,128], index: 2, kind: input, shape index: {}]
  %s3 = inlined_call_operand.hbm [shape: f32[32,128], index: 3, kind: output, shape index: {}]
  %s4 = sld [smem:[#allocation0]]
  $region56: #{tpu_custom_call.1} parent=0
    _
  %s6 = ssub.s32 1, %s4
  %s7 = scalar_select 0, %s6, %s4
  %9 = dma.hbm_to_smem %s0, 16, [#allocation3], [#allocation2]
  %10 = dma.done [#allocation2], 16
  %11 = sfence
  $region1: #{tpu_custom_call.1} parent=0
    #allocation4 [shape = 'u8[32768]{0}', space=vmem, size = 0x8000, scoped, tag = 'input window, operand 1, single buffered']
    #allocation5 [shape = 's32[2]{0}', space=sflag, size = 0x8, scoped, tag = 'scoped memory for tpu_custom_call.1']
    #allocation6 [shape = 's32[2]{0}', space=sflag, size = 0x8, scoped, tag = 'scoped memory for tpu_custom_call.1']
    #allocation7 [shape = 'u8[8192]{0}', space=vmem, size = 0x2000, scoped, tag = 'input window, operand 2, single buffered']
    #allocation8 [shape = 's32[1]{0}', space=sflag, size = 0x4, scoped, tag = 'scoped memory for tpu_custom_call.1']
    #allocation9 [shape = 'u8[16384]{0}', space=vmem, size = 0x4000, scoped, tag = 'output window, operand 0']
    %12 = vsyncpa [#allocation5], 0
    %13 = vsyncpa [#allocation8], 0
    %14 = vsyncpa [#allocation6], 0
    %s15 = scalar_lea.sflag [#allocation6], 1
    %16 = vsyncpa %s15, 0
    loop: start=0, step=1, limit=4
    $region2: #{tpu_custom_call.1} parent=1 // loop_pre_header
      _
    $region3: #{tpu_custom_call.1} parent=1 // loop_header
      %s18 = sphi 0, %s22
      %p19 = scmp.ge.s32.totalorder %s18, 4
      %s25 = sphi 0, %s37
      %s26 = sphi 0, %s33
      %s27 = sphi 0, %s25
      %s28 = sphi 0, %s26
      %s29 = sphi 0, %s27
      %s30 = sphi 0, %s28
      %s38 = sphi 0, %s38
      %s40 = sphi 0, %s38
      %s41 = sphi 0, %s40
      %s55 = sphi 0, %s41
      %s61 = sphi 0, %s63
      %s64 = sphi 0, %s61
      %s65 = sphi 0, %s64
      %s81 = sphi 0, %s65
      %s89 = sphi 0, %s91
      %s92 = sphi 0, %s89
      %s93 = sphi 0, %s92
      %s109 = sphi 0, %s93
    $region4: #{tpu_custom_call.1} parent=1 // loop_header_branch
      %21 = sbr.rel (%p19) target = $region8
    $region5: #{tpu_custom_call.1} parent=1 // loop_body
      %s23 = ssub.s32 %s18, 1
      %s24 = ssub.s32 %s18, 2
      %s31 = sadd.s32 1, %s26
      %p32 = scmp.ge.s32.totalorder %s31, 2
      %s33 = scalar_select %p32, 0, %s31
      %s34 = sadd.s32 1, %s25
      %s35 = scalar_select %p32, %s34, %s25
      %p36 = scmp.ge.s32.totalorder %s35, 1
      %s37 = scalar_select %p36, 0, %s35
      %s39 = sadd.s32 %s38, 1
      %p42 = scmp.eq.s32.totalorder %s18, 1
      %p43 = scmp.ne.s32.totalorder %s38, %s40
      %p44 = scmp.eq.s32.totalorder %s18, 0
      %p45 = por %p43, %p44
      %p46 = scmp.ne.s32.totalorder %s38, %s40
      %p47 = scmp.eq.s32.totalorder %s23, 1
      %p48 = por %p46, %p47
      %p49 = scmp.ne.s32.totalorder %s40, %s41
      %p50 = scmp.eq.s32.totalorder %s23, 0
      %p51 = por %p49, %p50
      %p52 = scmp.ne.s32.totalorder %s40, %s41
      %p53 = scmp.eq.s32.totalorder %s24, 1
      %p54 = por %p52, %p53
      %p56 = scmp.ne.s32.totalorder %s41, %s55
      %p57 = scmp.eq.s32.totalorder %s24, 0
      %p58 = por %p56, %p57
      %s59 = ssub.s32 %s25, %s37
      %p60 = scmp.eq.s32.totalorder %s59, 0
      %s62 = sadd.s32 %s61, 1
      %s63 = scalar_select %p60, %s61, %s62
      %p66 = pneg %p60
      %p67 = scmp.eq.s32.totalorder %s18, 1
      %p68 = por %p66, %p67
      %p69 = scmp.ne.s32.totalorder %s61, %s64
      %p70 = scmp.eq.s32.totalorder %s18, 0
      %p71 = por %p69, %p70
      %p72 = scmp.ne.s32.totalorder %s61, %s64
      %p73 = scmp.eq.s32.totalorder %s23, 1
      %p74 = por %p72, %p73
      %p75 = scmp.ne.s32.totalorder %s64, %s65
      %p76 = scmp.eq.s32.totalorder %s23, 0
      %p77 = por %p75, %p76
      %p78 = scmp.ne.s32.totalorder %s64, %s65
      %p79 = scmp.eq.s32.totalorder %s24, 1
      %p80 = por %p78, %p79
      %p82 = scmp.ne.s32.totalorder %s65, %s81
      %p83 = scmp.eq.s32.totalorder %s24, 0
      %p84 = por %p82, %p83
      %s85 = sadd.s32 %s26, %s25
      %s86 = sadd.s32 %s33, %s37
      %s87 = ssub.s32 %s85, %s86
      %p88 = scmp.eq.s32.totalorder %s87, 0
      %s90 = sadd.s32 %s89, 1
      %s91 = scalar_select %p88, %s89, %s90
      %p94 = pneg %p88
      %p95 = scmp.eq.s32.totalorder %s18, 1
      %p96 = por %p94, %p95
      %p97 = scmp.ne.s32.totalorder %s89, %s92
      %p98 = scmp.eq.s32.totalorder %s18, 0
      %p99 = por %p97, %p98
      %p100 = scmp.ne.s32.totalorder %s89, %s92
      %p101 = scmp.eq.s32.totalorder %s23, 1
      %p102 = por %p100, %p101
      %p103 = scmp.ne.s32.totalorder %s92, %s93
      %p104 = scmp.eq.s32.totalorder %s23, 0
      %p105 = por %p103, %p104
      %p106 = scmp.ne.s32.totalorder %s92, %s93
      %p107 = scmp.eq.s32.totalorder %s24, 1
      %p108 = por %p106, %p107
      %p110 = scmp.ne.s32.totalorder %s93, %s109
      %p111 = scmp.eq.s32.totalorder %s24, 0
      %p112 = por %p110, %p111
      %p113 = scmp.le.s32.totalorder 1, %s18
      %p114 = scmp.lt.s32.totalorder %s18, 3
      %p115 = pnand %p113, %p114
      %p116 = pneg %p115
      // Predicated region
      $region9: #{tpu_custom_call.1} parent=5 // pred_check
        _
      $region10: #{tpu_custom_call.1} parent=5 // pred_check_branch
        %118 = sbr.rel (%p115) target = $region12
      $region11: #{tpu_custom_call.1} parent=5 // pred_region
        %s119 = ssub.s32 %s18, 1
        // Predicated region
        $region13: #{tpu_custom_call.1} parent=11 // pred_check
          %p120 = pneg %p51
        $region14: #{tpu_custom_call.1} parent=11 // pred_check_branch
          %122 = sbr.rel (%p120) target = $region16
        $region15: #{tpu_custom_call.1} parent=11 // pred_region
          %s124 = ssub.s32 1024, 1024
          %125 = vsyncadd [#allocation5], %s124
          %s126 = sshll.u32 [#allocation4], 4
          %s127 = int_to_ptr.vmem [resolvable:$true] %s126
          %132 = dma.hbm_to_vmem [thread:$0]  %s1, 1024, %s127, [#allocation5], 128, 128, 8
        $region16: #{tpu_custom_call.1} parent=11 // pred_fallthru
          _
        // Predicated region
        $region17: #{tpu_custom_call.1} parent=11 // pred_check
          %p133 = pneg %p77
        $region18: #{tpu_custom_call.1} parent=11 // pred_check_branch
          %135 = sbr.rel (%p133) target = $region20
        $region19: #{tpu_custom_call.1} parent=11 // pred_region
          %s136 = smul.u32 2, %s27
          %s138 = ssub.s32 256, 256
          %139 = vsyncadd [#allocation8], %s138
          %s140 = smul.addr %s136, 128
          %s141 = scalar_lea.hbm %s2, %s140
          %s142 = sshll.u32 [#allocation7], 4
          %s143 = int_to_ptr.vmem [resolvable:$true] %s142
          %148 = dma.hbm_to_vmem [thread:$0]  %s141, 256, %s143, [#allocation8], 128, 128, 8
        $region20: #{tpu_custom_call.1} parent=11 // pred_fallthru
          _
      $region12: #{tpu_custom_call.1} parent=5 // pred_fallthru
        _
      %p149 = scmp.lt.s32.totalorder %s18, 2
      // Predicated region
      $region21: #{tpu_custom_call.1} parent=5 // pred_check
        %p150 = pneg %p149
      $region22: #{tpu_custom_call.1} parent=5 // pred_check_branch
        %152 = sbr.rel (%p150) target = $region24
      $region23: #{tpu_custom_call.1} parent=5 // pred_region
        _
      $region24: #{tpu_custom_call.1} parent=5 // pred_fallthru
        _
      %p153 = scmp.le.s32.totalorder 1, %s18
      %p154 = scmp.lt.s32.totalorder %s18, 3
      %p155 = pnand %p153, %p154
      %p156 = pneg %p155
      // Predicated region
      $region25: #{tpu_custom_call.1} parent=5 // pred_check
        _
      $region26: #{tpu_custom_call.1} parent=5 // pred_check_branch
        %158 = sbr.rel (%p155) target = $region28
      $region27: #{tpu_custom_call.1} parent=5 // pred_region
        %s159 = ssub.s32 %s18, 1
        // Predicated region
        $region29: #{tpu_custom_call.1} parent=27 // pred_check
          %p160 = pneg %p51
        $region30: #{tpu_custom_call.1} parent=27 // pred_check_branch
          %162 = sbr.rel (%p160) target = $region32
        $region31: #{tpu_custom_call.1} parent=27 // pred_region
          %163 = dma.done [#allocation5], 1024
        $region32: #{tpu_custom_call.1} parent=27 // pred_fallthru
          _
        // Predicated region
        $region33: #{tpu_custom_call.1} parent=27 // pred_check
          %p164 = pneg %p77
        $region34: #{tpu_custom_call.1} parent=27 // pred_check_branch
          %166 = sbr.rel (%p164) target = $region36
        $region35: #{tpu_custom_call.1} parent=27 // pred_region
          %167 = dma.done [#allocation8], 256
        $region36: #{tpu_custom_call.1} parent=27 // pred_fallthru
          _
        %p168 = pneg %p51
        %p169 = pneg %p48
        %p170 = pneg %p77
        %p171 = pneg %p74
        %p172 = pneg %p105
        %p173 = pneg %p102
        %s174 = sand.u32 %s92, 1
        %s175 = scalar_lea.sflag [#allocation6], %s174
        %s176 = sand.u32 %s92, 1
        %s177 = smul.addr %s176, 16
        %s178 = scalar_lea.vmem [#allocation9], %s177
        %s179 = smul.u32 2, %s27
        %s180 = sadd.s32 %s28, %s27
        %s181 = smul.u32 2, %s180
        %s182 = smul.u32 %s28, 16
        %s183 = smul.u32 %s27, 16
        %s184 = sadd.s32 %s182, %s183
        loop: start=0, step=1, limit=16
        $region37: #{tpu_custom_call.1} parent=27 // loop_pre_header
          _
        $region38: #{tpu_custom_call.1} parent=27 // loop_header
          %s186 = sphi 0, %s190
          %p187 = scmp.ge.s32.totalorder %s186, 16
        $region39: #{tpu_custom_call.1} parent=27 // loop_header_branch
          %189 = sbr.rel (%p187) target = $region43
        $region40: #{tpu_custom_call.1} parent=27 // loop_body
          %s191 = sadd.s32 %s184, %s186
          %s192 = sld [smem:[#allocation3 + %s191]]
          %s193 = scalar_lea.vmem [#allocation4], %s192
          %v194 = vld [vmem:[%s193] sm:$0x1]
          %s195 = scalar_lea.vmem %s178, %s186 [#allocation9]
          %196 = vst [vmem:[%s195] sm:$0x1] %v194
        $region41: #{tpu_custom_call.1} parent=27 // loop_footer
          %s190 = sadd.s32 1, %s186
        $region42: #{tpu_custom_call.1} parent=27 // loop_footer_branch
          %185 = sbr.rel target = $region38
        $region43: #{tpu_custom_call.1} parent=27 // loop_exit
          _
        %v197 = vld [vmem:[%s178] sm:$0xff]
        %v198 = vld [vmem:[%s178 + $0x8] sm:$0xff]
        %v199 = vld [vmem:[#allocation7] sm:$0xff]
        %v200 = vld [vmem:[#allocation7 + $0x8] sm:$0xff]
        %v201 = vadd.f32 %v197, %v199
        %v202 = vadd.f32 %v198, %v200
        %203 = vst [vmem:[%s178] sm:$0xff] %v201
        %204 = vst [vmem:[%s178 + $0x8] sm:$0xff] %v202
        %s205 = sand.u32 %s92, 1
        %s206 = scalar_lea.sflag [#allocation6], %s205
        %s207 = sand.u32 %s92, 1
        %s208 = smul.addr %s207, 16
        %s209 = scalar_lea.vmem [#allocation9], %s208
        // Predicated region
        $region44: #{tpu_custom_call.1} parent=27 // pred_check
          %p210 = pneg %p102
        $region45: #{tpu_custom_call.1} parent=27 // pred_check_branch
          %212 = sbr.rel (%p210) target = $region47
        $region46: #{tpu_custom_call.1} parent=27 // pred_region
          %s213 = sadd.s32 %s28, %s27
          %s214 = smul.u32 2, %s213
          %s216 = ssub.s32 256, 256
          %217 = vsyncadd %s206, %s216
          %s218 = smul.addr %s214, 128
          %s219 = scalar_lea.hbm %s3, %s218
          %s220 = sshll.u32 %s209, 4
          %s221 = int_to_ptr.vmem [resolvable:$true] %s220
          %226 = dma.vmem_to_hbm [thread:$0]  %s221, 256, %s219, %s206, 128, 128, 8
        $region47: #{tpu_custom_call.1} parent=27 // pred_fallthru
          _
      $region28: #{tpu_custom_call.1} parent=5 // pred_fallthru
        _
      %p227 = scmp.le.s32.totalorder 2, %s18
      // Predicated region
      $region48: #{tpu_custom_call.1} parent=5 // pred_check
        %p228 = pneg %p227
      $region49: #{tpu_custom_call.1} parent=5 // pred_check_branch
        %230 = sbr.rel (%p228) target = $region51
      $region50: #{tpu_custom_call.1} parent=5 // pred_region
        %s231 = ssub.s32 %s18, 2
        // Predicated region
        $region52: #{tpu_custom_call.1} parent=50 // pred_check
          %p232 = pneg %p108
        $region53: #{tpu_custom_call.1} parent=50 // pred_check_branch
          %234 = sbr.rel (%p232) target = $region55
        $region54: #{tpu_custom_call.1} parent=50 // pred_region
          %s235 = sand.u32 %s93, 1
          %s236 = scalar_lea.sflag [#allocation6], %s235
          %s237 = sand.u32 %s93, 1
          %s238 = smul.addr %s237, 16
          %s239 = scalar_lea.vmem [#allocation9], %s238
          %240 = dma.done %s236, 256
        $region55: #{tpu_custom_call.1} parent=50 // pred_fallthru
          _
      $region51: #{tpu_custom_call.1} parent=5 // pred_fallthru
        _
    $region6: #{tpu_custom_call.1} parent=1 // loop_footer
      %s22 = sadd.s32 1, %s18
    $region7: #{tpu_custom_call.1} parent=1 // loop_footer_branch
      %17 = sbr.rel target = $region3
    $region8: #{tpu_custom_call.1} parent=1 // loop_exit
      _
    %241 = vsyncpa [#allocation5], 1
    %s242 = scalar_lea.sflag [#allocation5], 1
    %243 = vsyncpa %s242, 1
    %244 = vsyncpa [#allocation8], 1
    %245 = vsyncpa [#allocation6], 1
    %s246 = scalar_lea.sflag [#allocation6], 1
    %247 = vsyncpa %s246, 1

</llo_original>
